<compile_context>
chip_gen: v7x
topology: tpu7x:2x2x1
jax: 0.10.0
libtpu: 0.0.40
codegen_flags: <defaults>
</compile_context>

<pallas_src>
import functools

import jax
import jax.numpy as jnp
from jax import lax
from jax.experimental import pallas as pl
from jax.experimental.pallas import tpu as pltpu

K_INPUT = 12
K_HIDDEN1 = 64
K_HIDDEN2 = 64
K_OUTPUT = 12

_LANE = 128
# Safe cross-generation default (v5e 16 MiB scoped-VMEM is the tightest); v6e/v7x can
# raise to 32K if desired (working set still fits under the explicit 32 MiB limit set below).
_DEFAULT_MAX_TILE_B = 16384


def _mlp_kernel(x_ref, w1_ref, b1_ref, w2_ref, b2_ref, w3_ref, b3_ref, oT_ref,
                *, total_b, tile_b):
    x = x_ref[...]                                                     # (tile_b, 12) f32
    if total_b % tile_b != 0:
        # Ragged last block: rows past `total_b` hold undefined VMEM contents; zero
        # them so no Inf/NaN flows into exp().  Static guard -> no cost on the
        # divisible fast path; otherwise a couple of cheap VPU ops per step.
        valid = total_b - pl.program_id(0) * tile_b
        row = lax.broadcasted_iota(jnp.int32, (tile_b, 1), 0)
        x = jnp.where(row < valid, x, 0.0)

    xb = x.astype(jnp.bfloat16)
    # Layer 1 (feature-major): contract x's feature axis (1) against W1's in-axis (1):
    # (64,12) x (tile_b,12) -> (64, tile_b).  Bias (64,1) broadcasts along lanes.
    h1 = lax.dot_general(w1_ref[...], xb, (((1,), (1,)), ((), ())),
                         preferred_element_type=jnp.float32) + b1_ref[...]
    h1 = jnp.maximum(h1, 0.0)
    # Layer 2: Linear + ReLU -> (64, tile_b)
    h2 = jnp.dot(w2_ref[...], h1.astype(jnp.bfloat16),
                 preferred_element_type=jnp.float32) + b2_ref[...]
    h2 = jnp.maximum(h2, 0.0)
    # Layer 3: Linear -> (12, tile_b)
    logits = jnp.dot(w3_ref[...], h2.astype(jnp.bfloat16),
                     preferred_element_type=jnp.float32) + b3_ref[...]
    # Numerically stable softmax over the 12-row feature axis; batch axis stays
    # lane-dense for an unmasked full-lane store.  Exact normalization (no approx
    # reciprocal) so every output row sums to 1 to f32 precision.
    m = jnp.max(logits, axis=0, keepdims=True)
    e = jnp.exp(logits - m)
    oT_ref[...] = e / jnp.sum(e, axis=0, keepdims=True)


def crop_model_forward(x, params, *, max_tile_b=_DEFAULT_MAX_TILE_B):
    """x: (B, 12) float32 -> (B, 12) softmax probabilities over Kharif crops."""
    w1, b1, w2, b2, w3, b3 = params
    B, feat = x.shape
    assert feat == K_INPUT

    # bf16 matmul operands (f32 accumulation in-kernel); weights are tiny, cast once.
    w1b = w1.astype(jnp.bfloat16)
    w2b = w2.astype(jnp.bfloat16)
    w3b = w3.astype(jnp.bfloat16)

    # Tile selection: lane-multiple tiles, and >= 2 grid steps when B >= 256 so the
    # "parallel" grid axis actually uses both TensorCores on v7x.
    max_tile_b = max(_LANE, (max_tile_b // _LANE) * _LANE)
    if B <= _LANE:
        tile_b = B                      # single full-extent tile (block dims == array dims)
    elif B < 2 * _LANE:
        tile_b = _LANE                  # 2 steps, ragged last tile handled in-kernel
    else:
        half = ((pl.cdiv(B, 2) + _LANE - 1) // _LANE) * _LANE
        tile_b = min(max_tile_b, half)
    grid = (pl.cdiv(B, tile_b),)

    resident = lambda i: (0, 0)         # constant block index -> params stay VMEM-resident
    grid_spec = pltpu.PrefetchScalarGridSpec(
        num_scalar_prefetch=0,
        grid=grid,
        in_specs=[
            pl.BlockSpec((tile_b, K_INPUT), lambda i: (i, 0)),       # x streamed as (B,12)
            pl.BlockSpec((K_HIDDEN1, K_INPUT), resident),
            pl.BlockSpec((K_HIDDEN1, 1), resident),
            pl.BlockSpec((K_HIDDEN2, K_HIDDEN1), resident),
            pl.BlockSpec((K_HIDDEN2, 1), resident),
            pl.BlockSpec((K_OUTPUT, K_HIDDEN2), resident),
            pl.BlockSpec((K_OUTPUT, 1), resident),
        ],
        out_specs=pl.BlockSpec((K_OUTPUT, tile_b), lambda i: (0, i)),
    )

    param_bytes = (w1b.size + w2b.size + w3b.size) * 2 + (b1.size + b2.size + b3.size) * 4
    cost = pl.CostEstimate(
        flops=2 * B * (K_INPUT * K_HIDDEN1 + K_HIDDEN1 * K_HIDDEN2 + K_HIDDEN2 * K_OUTPUT),
        transcendentals=B * K_OUTPUT,
        bytes_accessed=B * K_INPUT * 4 + B * K_OUTPUT * 4 + param_bytes,
    )

    kernel = functools.partial(_mlp_kernel, total_b=B, tile_b=tile_b)
    oT = pl.pallas_call(
        kernel,
        out_shape=jax.ShapeDtypeStruct((K_OUTPUT, B), jnp.float32),
        grid_spec=grid_spec,
        compiler_params=pltpu.CompilerParams(
            dimension_semantics=("parallel",),          # megacore sharding on v7x
            vmem_limit_bytes=32 * 1024 * 1024,          # covers 16K tiles on v5e's 16 MiB default
        ),
        cost_estimate=cost,
    )(x, w1b, b1, w2b, b2, w3b, b3)

    # Output is feature-major (12, B) for lane-dense stores; one cheap 48 B/row
    # transpose restores the (B, 12) module output layout.
    return jnp.transpose(oT)


def init_params(key):
    """Deterministic init mimicking nn.Linear default (uniform +/- 1/sqrt(fan_in)).

    Weights stored torch-style as (out_features, in_features), biases as
    (out_features, 1) — exactly the layout the feature-major kernel wants.
    """
    ks = jax.random.split(key, 6)

    def linear(kw, kb, fan_in, fan_out):
        bound = 1.0 / jnp.sqrt(float(fan_in))
        w = jax.random.uniform(kw, (fan_out, fan_in), jnp.float32, -bound, bound)
        b = jax.random.uniform(kb, (fan_out, 1), jnp.float32, -bound, bound)
        return w, b

    w1, b1 = linear(ks[0], ks[1], K_INPUT, K_HIDDEN1)
    w2, b2 = linear(ks[2], ks[3], K_HIDDEN1, K_HIDDEN2)
    w3, b3 = linear(ks[4], ks[5], K_HIDDEN2, K_OUTPUT)
    return (w1, b1, w2, b2, w3, b3)


def reference_forward(x, params):
    """Pure-f32 reference matching the PyTorch forward semantics."""
    w1, b1, w2, b2, w3, b3 = params
    h1 = jnp.maximum(x @ w1.T + b1.T, 0.0)
    h2 = jnp.maximum(h1 @ w2.T + b2.T, 0.0)
    logits = h2 @ w3.T + b3.T
    return jax.nn.softmax(logits, axis=-1)


if __name__ == "__main__":
    key = jax.random.PRNGKey(0)
    k_param, k_x1, k_x2 = jax.random.split(key, 3)
    params = init_params(k_param)

    # Case 1: small batch of scaled soil/weather parameters (single full-extent tile).
    x_small = jax.random.normal(k_x1, (8, K_INPUT), dtype=jnp.float32)
    out_small = jax.block_until_ready(crop_model_forward(x_small, params))
    ref_small = reference_forward(x_small, params)
    assert out_small.shape == (8, K_OUTPUT)
    # Tolerance reflects bf16 matmul operands (f32 accumulation) vs f32 reference.
    assert jnp.allclose(out_small, ref_small, atol=1e-2, rtol=1e-2), "mismatch vs reference"
    assert jnp.allclose(jnp.sum(out_small, axis=-1), 1.0, atol=1e-4), "softmax rows must sum to 1"

    # Case 2: multi-step grid with a ragged last tile (exercises the in-kernel tail mask
    # and the >=2-step / megacore path).
    x_big = jax.random.normal(k_x2, (200, K_INPUT), dtype=jnp.float32)
    out_big = jax.block_until_ready(crop_model_forward(x_big, params))
    ref_big = reference_forward(x_big, params)
    assert out_big.shape == (200, K_OUTPUT)
    assert jnp.allclose(out_big, ref_big, atol=1e-2, rtol=1e-2), "mismatch vs reference (ragged)"
    assert jnp.allclose(jnp.sum(out_big, axis=-1), 1.0, atol=1e-4), "softmax rows must sum to 1 (ragged)"

    # TODO(synk): StandardScaler preprocessing, CSV-driven fit, and top-n prediction
    # post-processing are host-side utilities, not part of the forward hot path.
    # Rabi/Zaid variants only change the output width; reuse with K_OUTPUT=11/6.
    print("KERNEL_OK")
</pallas_src>

<mosaic_0001>
module attributes {stable_mosaic.version = 11 : i64} {
  func.func @_mlp_kernel(%arg0: i32, %arg1: memref<8x12xf32, #tpu.memory_space<vmem>>, %arg2: memref<64x12xbf16, #tpu.memory_space<vmem>>, %arg3: memref<64x1xf32, #tpu.memory_space<vmem>>, %arg4: memref<64x64xbf16, #tpu.memory_space<vmem>>, %arg5: memref<64x1xf32, #tpu.memory_space<vmem>>, %arg6: memref<12x64xbf16, #tpu.memory_space<vmem>>, %arg7: memref<12x1xf32, #tpu.memory_space<vmem>>, %arg8: memref<12x8xf32, #tpu.memory_space<vmem>>) attributes {dimension_semantics = [#tpu.dimension_semantics<parallel>], iteration_bounds = array<i64: 1>, scalar_prefetch = 0 : i64, scratch_operands = 0 : i64, tpu.core_type = #tpu.core_type<tc>, window_params = [{transform_indices = @transform_0, window_bounds = array<i64: 8, 12>}, {pipeline_mode = #tpu.pipeline_mode<synchronous>, transform_indices = @transform_1, window_bounds = array<i64: 64, 12>}, {pipeline_mode = #tpu.pipeline_mode<synchronous>, transform_indices = @transform_2, window_bounds = array<i64: 64, 1>}, {pipeline_mode = #tpu.pipeline_mode<synchronous>, transform_indices = @transform_3, window_bounds = array<i64: 64, 64>}, {pipeline_mode = #tpu.pipeline_mode<synchronous>, transform_indices = @transform_4, window_bounds = array<i64: 64, 1>}, {pipeline_mode = #tpu.pipeline_mode<synchronous>, transform_indices = @transform_5, window_bounds = array<i64: 12, 64>}, {pipeline_mode = #tpu.pipeline_mode<synchronous>, transform_indices = @transform_6, window_bounds = array<i64: 12, 1>}, {transform_indices = @transform_7, window_bounds = array<i64: 12, 8>}]} {
    %c0 = arith.constant 0 : index
    %c0_0 = arith.constant 0 : index
    %0 = vector.load %arg1[%c0, %c0_0] : memref<8x12xf32, #tpu.memory_space<vmem>>, vector<8x12xf32>
    %1 = arith.truncf %0 : vector<8x12xf32> to vector<8x12xbf16>
    %c0_1 = arith.constant 0 : index
    %c0_2 = arith.constant 0 : index
    %2 = vector.load %arg2[%c0_1, %c0_2] : memref<64x12xbf16, #tpu.memory_space<vmem>>, vector<64x12xbf16>
    %cst = arith.constant dense<0.000000e+00> : vector<64x8xf32>
    %3 = tpu.matmul %2, %1, %cst {dimension_numbers = #tpu.dot_dimension_numbers<[1], [1], [0], [0], [0, 0, 1, 0], [], []>} : vector<64x12xbf16>, vector<8x12xbf16>, vector<64x8xf32> -> vector<64x8xf32>
    %c0_3 = arith.constant 0 : index
    %c0_4 = arith.constant 0 : index
    %4 = vector.load %arg3[%c0_3, %c0_4] : memref<64x1xf32, #tpu.memory_space<vmem>>, vector<64x1xf32>
    %5 = vector.broadcast %4 : vector<64x1xf32> to vector<64x8xf32>
    %6 = arith.addf %3, %5 : vector<64x8xf32>
    %cst_5 = arith.constant 0.000000e+00 : f32
    %7 = vector.broadcast %cst_5 : f32 to vector<64x8xf32>
    %8 = arith.maximumf %6, %7 : vector<64x8xf32>
    %c0_6 = arith.constant 0 : index
    %c0_7 = arith.constant 0 : index
    %9 = vector.load %arg4[%c0_6, %c0_7] : memref<64x64xbf16, #tpu.memory_space<vmem>>, vector<64x64xbf16>
    %10 = arith.truncf %8 : vector<64x8xf32> to vector<64x8xbf16>
    %cst_8 = arith.constant dense<0.000000e+00> : vector<64x8xf32>
    %11 = tpu.matmul %9, %10, %cst_8 {dimension_numbers = #tpu.dot_dimension_numbers<[1], [0], [0], [1], [0, 0, 1, 1], [], []>} : vector<64x64xbf16>, vector<64x8xbf16>, vector<64x8xf32> -> vector<64x8xf32>
    %c0_9 = arith.constant 0 : index
    %c0_10 = arith.constant 0 : index
    %12 = vector.load %arg5[%c0_9, %c0_10] : memref<64x1xf32, #tpu.memory_space<vmem>>, vector<64x1xf32>
    %13 = vector.broadcast %12 : vector<64x1xf32> to vector<64x8xf32>
    %14 = arith.addf %11, %13 : vector<64x8xf32>
    %cst_11 = arith.constant 0.000000e+00 : f32
    %15 = vector.broadcast %cst_11 : f32 to vector<64x8xf32>
    %16 = arith.maximumf %14, %15 : vector<64x8xf32>
    %c0_12 = arith.constant 0 : index
    %c0_13 = arith.constant 0 : index
    %17 = vector.load %arg6[%c0_12, %c0_13] : memref<12x64xbf16, #tpu.memory_space<vmem>>, vector<12x64xbf16>
    %18 = arith.truncf %16 : vector<64x8xf32> to vector<64x8xbf16>
    %cst_14 = arith.constant dense<0.000000e+00> : vector<12x8xf32>
    %19 = tpu.matmul %17, %18, %cst_14 {dimension_numbers = #tpu.dot_dimension_numbers<[1], [0], [0], [1], [0, 0, 1, 1], [], []>} : vector<12x64xbf16>, vector<64x8xbf16>, vector<12x8xf32> -> vector<12x8xf32>
    %c0_15 = arith.constant 0 : index
    %c0_16 = arith.constant 0 : index
    %20 = vector.load %arg7[%c0_15, %c0_16] : memref<12x1xf32, #tpu.memory_space<vmem>>, vector<12x1xf32>
    %21 = vector.broadcast %20 : vector<12x1xf32> to vector<12x8xf32>
    %22 = arith.addf %19, %21 : vector<12x8xf32>
    %cst_17 = arith.constant dense<0xFF800000> : vector<8xf32>
    %23 = vector.multi_reduction <maximumf>, %22, %cst_17 [0] : vector<12x8xf32> to vector<8xf32>
    %24 = vector.shape_cast %23 : vector<8xf32> to vector<1x8xf32>
    %25 = vector.broadcast %24 : vector<1x8xf32> to vector<12x8xf32>
    %26 = arith.subf %22, %25 : vector<12x8xf32>
    %27 = math.exp %26 : vector<12x8xf32>
    %cst_18 = arith.constant dense<0.000000e+00> : vector<8xf32>
    %28 = vector.multi_reduction <add>, %27, %cst_18 [0] : vector<12x8xf32> to vector<8xf32>
    %29 = vector.shape_cast %28 : vector<8xf32> to vector<1x8xf32>
    %30 = vector.broadcast %29 : vector<1x8xf32> to vector<12x8xf32>
    %31 = arith.divf %27, %30 : vector<12x8xf32>
    %c0_19 = arith.constant 0 : index
    %c0_20 = arith.constant 0 : index
    %32 = vector.load %arg8[%c0_19, %c0_20] : memref<12x8xf32, #tpu.memory_space<vmem>>, vector<12x8xf32>
    tpu.vector_store %arg8[%c0_19, %c0_20], %31 {strides = array<i32>} : memref<12x8xf32, #tpu.memory_space<vmem>>, vector<12x8xf32>,
    return
  }
  func.func @transform_0(%arg0: i32) -> (i32, i32) {
    %c0_i32 = arith.constant 0 : i32
    %c0_i32_0 = arith.constant 0 : i32
    return %arg0, %c0_i32 : i32, i32
  }
  func.func @transform_1(%arg0: i32) -> (i32, i32) {
    %c0_i32 = arith.constant 0 : i32
    %c0_i32_0 = arith.constant 0 : i32
    %c0_i32_1 = arith.constant 0 : i32
    return %c0_i32, %c0_i32_0 : i32, i32
  }
  func.func @transform_2(%arg0: i32) -> (i32, i32) {
    %c0_i32 = arith.constant 0 : i32
    %c0_i32_0 = arith.constant 0 : i32
    %c0_i32_1 = arith.constant 0 : i32
    return %c0_i32, %c0_i32_0 : i32, i32
  }
  func.func @transform_3(%arg0: i32) -> (i32, i32) {
    %c0_i32 = arith.constant 0 : i32
    %c0_i32_0 = arith.constant 0 : i32
    %c0_i32_1 = arith.constant 0 : i32
    return %c0_i32, %c0_i32_0 : i32, i32
  }
  func.func @transform_4(%arg0: i32) -> (i32, i32) {
    %c0_i32 = arith.constant 0 : i32
    %c0_i32_0 = arith.constant 0 : i32
    %c0_i32_1 = arith.constant 0 : i32
    return %c0_i32, %c0_i32_0 : i32, i32
  }
  func.func @transform_5(%arg0: i32) -> (i32, i32) {
    %c0_i32 = arith.constant 0 : i32
    %c0_i32_0 = arith.constant 0 : i32
    %c0_i32_1 = arith.constant 0 : i32
    return %c0_i32, %c0_i32_0 : i32, i32
  }
  func.func @transform_6(%arg0: i32) -> (i32, i32) {
    %c0_i32 = arith.constant 0 : i32
    %c0_i32_0 = arith.constant 0 : i32
    %c0_i32_1 = arith.constant 0 : i32
    return %c0_i32, %c0_i32_0 : i32, i32
  }
  func.func @transform_7(%arg0: i32) -> (i32, i32) {
    %c0_i32 = arith.constant 0 : i32
    %c0_i32_0 = arith.constant 0 : i32
    return %c0_i32, %arg0 : i32, i32
  }
}

</mosaic_0001>

<llo_original>
// kernel: tpu_custom_call.1
$region0: #{tpu_custom_call.1}
  #allocation0 [shape = 'u32[]', space=smem, size = 0x4, offset = 0x4, fixed_abs, tag = 'smem constant byte address 0x4 - core index']
  #allocation1 [shape = 'u32[144,128]{1,0:T(1,128)}', space=vmem, size = 0x12000, scoped, tag = 'internal scratch']
  %s0 = inlined_call_operand.vmem [shape: f32[8,12], index: 0, kind: input, shape index: {}]
  %s1 = inlined_call_operand.vmem [shape: bf16[64,12], index: 1, kind: input, shape index: {}]
  %s2 = inlined_call_operand.vmem [shape: f32[64,1], index: 2, kind: input, shape index: {}]
  %s3 = inlined_call_operand.vmem [shape: bf16[64,64], index: 3, kind: input, shape index: {}]
  %s4 = inlined_call_operand.vmem [shape: f32[64,1], index: 4, kind: input, shape index: {}]
  %s5 = inlined_call_operand.vmem [shape: bf16[12,64], index: 5, kind: input, shape index: {}]
  %s6 = inlined_call_operand.vmem [shape: f32[12,1], index: 6, kind: input, shape index: {}]
  %s7 = inlined_call_operand.vmem [shape: f32[12,8], index: 7, kind: output, shape index: {}]
  %s8 = sld [smem:[#allocation0]]
  $region38: #{tpu_custom_call.1} parent=0
    _
  %s10 = ssub.s32 1, %s8
  %s11 = scalar_select 0, %s10, %s8
  // Predicated region
  $region2: #{tpu_custom_call.1} parent=0 // pred_check
    _
  $region3: #{tpu_custom_call.1} parent=0 // pred_check_branch
    %13 = sbr.rel (0) target = $region5
  $region4: #{tpu_custom_call.1} parent=0 // pred_region
    _
  $region5: #{tpu_custom_call.1} parent=0 // pred_fallthru
    _
  // Predicated region
  $region6: #{tpu_custom_call.1} parent=0 // pred_check
    _
  $region7: #{tpu_custom_call.1} parent=0 // pred_check_branch
    %15 = sbr.rel (0) target = $region9
  $region8: #{tpu_custom_call.1} parent=0 // pred_region
    _
  $region9: #{tpu_custom_call.1} parent=0 // pred_fallthru
    _
  // Predicated region
  $region10: #{tpu_custom_call.1} parent=0 // pred_check
    _
  $region11: #{tpu_custom_call.1} parent=0 // pred_check_branch
    %17 = sbr.rel (0) target = $region13
  $region12: #{tpu_custom_call.1} parent=0 // pred_region
    _
  $region13: #{tpu_custom_call.1} parent=0 // pred_fallthru
    _
  // Predicated region
  $region14: #{tpu_custom_call.1} parent=0 // pred_check
    _
  $region15: #{tpu_custom_call.1} parent=0 // pred_check_branch
    %19 = sbr.rel (0) target = $region17
  $region16: #{tpu_custom_call.1} parent=0 // pred_region
    _
  $region17: #{tpu_custom_call.1} parent=0 // pred_fallthru
    _
  // Predicated region
  $region18: #{tpu_custom_call.1} parent=0 // pred_check
    _
  $region19: #{tpu_custom_call.1} parent=0 // pred_check_branch
    %21 = sbr.rel (0) target = $region21
  $region20: #{tpu_custom_call.1} parent=0 // pred_region
    _
  $region21: #{tpu_custom_call.1} parent=0 // pred_fallthru
    _
  // Predicated region
  $region22: #{tpu_custom_call.1} parent=0 // pred_check
    _
  $region23: #{tpu_custom_call.1} parent=0 // pred_check_branch
    %23 = sbr.rel (0) target = $region25
  $region24: #{tpu_custom_call.1} parent=0 // pred_region
    _
  $region25: #{tpu_custom_call.1} parent=0 // pred_fallthru
    _
  // Predicated region
  $region26: #{tpu_custom_call.1} parent=0 // pred_check
    _
  $region27: #{tpu_custom_call.1} parent=0 // pred_check_branch
    %25 = sbr.rel (0) target = $region29
  $region28: #{tpu_custom_call.1} parent=0 // pred_region
    _
  $region29: #{tpu_custom_call.1} parent=0 // pred_fallthru
    _
  %v27 = vld [vmem:[%s0] sm:$0xff]
  %v28 = vpack.c.bf16 %v27, %v27
  %v29 = vld [vmem:[%s1] sm:$0xf]
  %v30 = vld [vmem:[%s1 + $0x4] sm:$0xf]
  %v31 = vld [vmem:[%s1 + $0x8] sm:$0xf]
  %v32 = vld [vmem:[%s1 + $0xc] sm:$0xf]
  %v33 = vld [vmem:[%s1 + $0x10] sm:$0xf]
  %v34 = vld [vmem:[%s1 + $0x14] sm:$0xf]
  %v35 = vld [vmem:[%s1 + $0x18] sm:$0xf]
  %v36 = vld [vmem:[%s1 + $0x1c] sm:$0xf]
  %v37 = vld [vmem:[%s2] sm:$0xff]
  %v38 = vld [vmem:[%s2 + $0x8] sm:$0xff]
  %v39 = vld [vmem:[%s2 + $0x10] sm:$0xff]
  %v40 = vld [vmem:[%s2 + $0x18] sm:$0xff]
  %v41 = vld [vmem:[%s2 + $0x20] sm:$0xff]
  %v42 = vld [vmem:[%s2 + $0x28] sm:$0xff]
  %v43 = vld [vmem:[%s2 + $0x30] sm:$0xff]
  %v44 = vld [vmem:[%s2 + $0x38] sm:$0xff]
  %46 = vset.pattern.permute.xlu0 0
  %47 = vperm.xlu0 %46, %v37
  %v48 = vpop.permute.xlu0 %47
  %51 = vset.pattern.permute.xlu0 0
  %52 = vperm.xlu0 %51, %v38
  %v53 = vpop.permute.xlu0 %52
  %56 = vset.pattern.permute.xlu0 0
  %57 = vperm.xlu0 %56, %v39
  %v58 = vpop.permute.xlu0 %57
  %61 = vset.pattern.permute.xlu0 0
  %62 = vperm.xlu0 %61, %v40
  %v63 = vpop.permute.xlu0 %62
  %66 = vset.pattern.permute.xlu0 0
  %67 = vperm.xlu0 %66, %v41
  %v68 = vpop.permute.xlu0 %67
  %71 = vset.pattern.permute.xlu0 0
  %72 = vperm.xlu0 %71, %v42
  %v73 = vpop.permute.xlu0 %72
  %76 = vset.pattern.permute.xlu0 0
  %77 = vperm.xlu0 %76, %v43
  %v78 = vpop.permute.xlu0 %77
  %81 = vset.pattern.permute.xlu0 0
  %82 = vperm.xlu0 %81, %v44
  %v83 = vpop.permute.xlu0 %82
  %v93 = vunpack.c.l.b16 %v29
  %v94 = vunpack.c.l.b16 %v30
  %v95 = vunpack.c.l.b16 %v31
  %v96 = vunpack.c.l.b16 %v32
  %v97 = vunpack.c.l.b16 %v33
  %v98 = vunpack.c.l.b16 %v34
  %v99 = vunpack.c.l.b16 %v35
  %v100 = vunpack.c.l.b16 %v36
  %v101 = vpack.c.b16 %v94, %v93
  %v102 = vpack.c.b16 %v96, %v95
  %v103 = vpack.c.b16 %v98, %v97
  %v104 = vpack.c.b16 %v100, %v99
  %vm105 = vcmask 97280
  %v107 = vsel %vm105, %v101, 0
  %v110 = vsel %vm105, %v102, 0
  %v113 = vsel %vm105, %v103, 0
  %v116 = vsel %vm105, %v104, 0
  %v119 = vsel %vm105, %v28, 0
  %121 = vmatprep.subr.bf16.mxu0 0
  %122 = vmatpush1.bf16.xpose.msra.mxu0 %v119
  %123 = vmatprep.subr.bf16.mxu0 0
  %124 = vmatpush1.bf16.xpose.msra.mxu0 0
  %125 = vmatprep.subr.bf16.mxu0 0
  %126 = vmatpush1.bf16.xpose.msra.mxu0 0
  %127 = vmatprep.subr.bf16.mxu0 0
  %128 = vmatpush1.bf16.xpose.msra.mxu0 0
  %129 = vmatprep.subr.bf16.mxu0 0
  %130 = vmatpush1.bf16.xpose.msra.mxu0 0
  %131 = vmatprep.subr.bf16.mxu0 0
  %132 = vmatpush1.bf16.xpose.msra.mxu0 0
  %133 = vmatprep.subr.bf16.mxu0 0
  %134 = vmatpush1.bf16.xpose.msra.mxu0 0
  %135 = vmatprep.subr.bf16.mxu0 0
  %136 = vmatpush1.bf16.xpose.msra.mxu0 0
  %137 = vmatprep.subr.bf16.mxu0 0
  %138 = vmatpush1.bf16.xpose.msra.mxu0 0
  %139 = vmatprep.subr.bf16.mxu0 0
  %140 = vmatpush1.bf16.xpose.msra.mxu0 0
  %141 = vmatprep.subr.bf16.mxu0 0
  %142 = vmatpush1.bf16.xpose.msra.mxu0 0
  %143 = vmatprep.subr.bf16.mxu0 0
  %144 = vmatpush1.bf16.xpose.msra.mxu0 0
  %145 = vmatprep.subr.bf16.mxu0 0
  %146 = vmatpush1.bf16.xpose.msra.mxu0 0
  %147 = vmatprep.subr.bf16.mxu0 0
  %148 = vmatpush1.bf16.xpose.msra.mxu0 0
  %149 = vmatprep.subr.bf16.mxu0 0
  %150 = vmatpush1.bf16.xpose.msra.mxu0 0
  %151 = vmatprep.subr.bf16.mxu0 0
  %152 = vmatpush1.bf16.xpose.msra.mxu0 0
  %153 = vmatprep.mubr.bf16.mxu0 0
  %154 = vmatmul.mubr.bf16.gmra.mrb[0].mxu0 %v107
  %v155 = vpop.f32.mrb[0].mxu0
  %v156 = vadd.f32 %v48, %v155
  %v157 = vpop.f32.mrb[0].mxu0
  %v158 = vpop.f32.mrb[0].mxu0
  %v159 = vadd.f32 %v53, %v158
  %v160 = vpop.f32.mrb[0].mxu0
  %161 = vmatprep.mubr.bf16.mxu0 0
  %162 = vmatmul.mubr.bf16.gmra.mrb[0].mxu0 %v110
  %v163 = vpop.f32.mrb[0].mxu0
  %v164 = vadd.f32 %v58, %v163
  %v165 = vpop.f32.mrb[0].mxu0
  %v166 = vpop.f32.mrb[0].mxu0
  %v167 = vadd.f32 %v63, %v166
  %v168 = vpop.f32.mrb[0].mxu0
  %169 = vmatprep.mubr.bf16.mxu0 0
  %170 = vmatmul.mubr.bf16.gmra.mrb[0].mxu0 %v113
  %v171 = vpop.f32.mrb[0].mxu0
  %v172 = vadd.f32 %v68, %v171
  %v173 = vpop.f32.mrb[0].mxu0
  %v174 = vpop.f32.mrb[0].mxu0
  %v175 = vadd.f32 %v73, %v174
  %v176 = vpop.f32.mrb[0].mxu0
  %177 = vmatprep.mubr.bf16.mxu0 0
  %178 = vmatmul.mubr.bf16.gmra.mrb[0].mxu0 %v116
  %v179 = vpop.f32.mrb[0].mxu0
  %v180 = vadd.f32 %v78, %v179
  %v181 = vpop.f32.mrb[0].mxu0
  %v182 = vpop.f32.mrb[0].mxu0
  %v183 = vadd.f32 %v83, %v182
  %v184 = vpop.f32.mrb[0].mxu0
  %185 = vdwg.mxu0
  %v186 = vmax.f32 %v156, 0.0
  %v187 = vmax.f32 %v159, 0.0
  %v188 = vmax.f32 %v164, 0.0
  %v189 = vmax.f32 %v167, 0.0
  %v190 = vmax.f32 %v172, 0.0
  %v191 = vmax.f32 %v175, 0.0
  %v192 = vmax.f32 %v180, 0.0
  %v193 = vmax.f32 %v183, 0.0
  %v194 = vld [vmem:[%s3] sm:$0xf]
  %v195 = vld [vmem:[%s3 + $0x4] sm:$0xf]
  %v196 = vld [vmem:[%s3 + $0x8] sm:$0xf]
  %v197 = vld [vmem:[%s3 + $0xc] sm:$0xf]
  %v198 = vld [vmem:[%s3 + $0x10] sm:$0xf]
  %v199 = vld [vmem:[%s3 + $0x14] sm:$0xf]
  %v200 = vld [vmem:[%s3 + $0x18] sm:$0xf]
  %v201 = vld [vmem:[%s3 + $0x1c] sm:$0xf]
  %v202 = vpack.c.bf16 %v187, %v186
  %v203 = vpack.c.bf16 %v189, %v188
  %v204 = vpack.c.bf16 %v191, %v190
  %v205 = vpack.c.bf16 %v193, %v192
  %v206 = vld [vmem:[%s4] sm:$0xff]
  %v207 = vld [vmem:[%s4 + $0x8] sm:$0xff]
  %v208 = vld [vmem:[%s4 + $0x10] sm:$0xff]
  %v209 = vld [vmem:[%s4 + $0x18] sm:$0xff]
  %v210 = vld [vmem:[%s4 + $0x20] sm:$0xff]
  %v211 = vld [vmem:[%s4 + $0x28] sm:$0xff]
  %v212 = vld [vmem:[%s4 + $0x30] sm:$0xff]
  %v213 = vld [vmem:[%s4 + $0x38] sm:$0xff]
  %215 = vset.pattern.permute.xlu0 0
  %216 = vperm.xlu0 %215, %v206
  %v217 = vpop.permute.xlu0 %216
  %220 = vset.pattern.permute.xlu0 0
  %221 = vperm.xlu0 %220, %v207
  %v222 = vpop.permute.xlu0 %221
  %225 = vset.pattern.permute.xlu0 0
  %226 = vperm.xlu0 %225, %v208
  %v227 = vpop.permute.xlu0 %226
  %230 = vset.pattern.permute.xlu0 0
  %231 = vperm.xlu0 %230, %v209
  %v232 = vpop.permute.xlu0 %231
  %235 = vset.pattern.permute.xlu0 0
  %236 = vperm.xlu0 %235, %v210
  %v237 = vpop.permute.xlu0 %236
  %240 = vset.pattern.permute.xlu0 0
  %241 = vperm.xlu0 %240, %v211
  %v242 = vpop.permute.xlu0 %241
  %245 = vset.pattern.permute.xlu0 0
  %246 = vperm.xlu0 %245, %v212
  %v247 = vpop.permute.xlu0 %246
  %250 = vset.pattern.permute.xlu0 0
  %251 = vperm.xlu0 %250, %v213
  %v252 = vpop.permute.xlu0 %251
  %v262 = vunpack.c.l.b16 %v194
  %v263 = vunpack.c.l.b16 %v195
  %v264 = vunpack.c.l.b16 %v196
  %v265 = vunpack.c.l.b16 %v197
  %v266 = vunpack.c.l.b16 %v198
  %v267 = vunpack.c.l.b16 %v199
  %v268 = vunpack.c.l.b16 %v200
  %v269 = vunpack.c.l.b16 %v201
  %v270 = vpack.c.b16 %v263, %v262
  %v271 = vpack.c.b16 %v265, %v264
  %v272 = vpack.c.b16 %v267, %v266
  %v273 = vpack.c.b16 %v269, %v268
  %vm274 = vcmask 523264
  %v276 = vsel %vm274, %v270, 0
  %v279 = vsel %vm274, %v271, 0
  %v282 = vsel %vm274, %v272, 0
  %v285 = vsel %vm274, %v273, 0
  %287 = vmatprep.subr.bf16.mxu0 0
  %288 = vmatpush1.bf16.msra.mxu0 %v202
  %289 = vmatprep.subr.bf16.mxu0 0
  %290 = vmatpush1.bf16.msra.mxu0 %v203
  %291 = vmatprep.subr.bf16.mxu0 0
  %292 = vmatpush1.bf16.msra.mxu0 %v204
  %293 = vmatprep.subr.bf16.mxu0 0
  %294 = vmatpush1.bf16.msra.mxu0 %v205
  %295 = vmatprep.subr.bf16.mxu0 0
  %296 = vmatpush1.bf16.msra.mxu0 0
  %297 = vmatprep.subr.bf16.mxu0 0
  %298 = vmatpush1.bf16.msra.mxu0 0
  %299 = vmatprep.subr.bf16.mxu0 0
  %300 = vmatpush1.bf16.msra.mxu0 0
  %301 = vmatprep.subr.bf16.mxu0 0
  %302 = vmatpush1.bf16.msra.mxu0 0
  %303 = vmatprep.subr.bf16.mxu0 0
  %304 = vmatpush1.bf16.msra.mxu0 0
  %305 = vmatprep.subr.bf16.mxu0 0
  %306 = vmatpush1.bf16.msra.mxu0 0
  %307 = vmatprep.subr.bf16.mxu0 0
  %308 = vmatpush1.bf16.msra.mxu0 0
  %309 = vmatprep.subr.bf16.mxu0 0
  %310 = vmatpush1.bf16.msra.mxu0 0
  %311 = vmatprep.subr.bf16.mxu0 0
  %312 = vmatpush1.bf16.msra.mxu0 0
  %313 = vmatprep.subr.bf16.mxu0 0
  %314 = vmatpush1.bf16.msra.mxu0 0
  %315 = vmatprep.subr.bf16.mxu0 0
  %316 = vmatpush1.bf16.msra.mxu0 0
  %317 = vmatprep.subr.bf16.mxu0 0
  %318 = vmatpush1.bf16.msra.mxu0 0
  %319 = vmatprep.mubr.bf16.mxu0 0
  %320 = vmatmul.mubr.bf16.gmra.mrb[0].mxu0 %v276
  %v321 = vpop.f32.mrb[0].mxu0
  %v322 = vadd.f32 %v217, %v321
  %v323 = vpop.f32.mrb[0].mxu0
  %v324 = vpop.f32.mrb[0].mxu0
  %v325 = vadd.f32 %v222, %v324
  %v326 = vpop.f32.mrb[0].mxu0
  %327 = vmatprep.mubr.bf16.mxu0 0
  %328 = vmatmul.mubr.bf16.gmra.mrb[0].mxu0 %v279
  %v329 = vpop.f32.mrb[0].mxu0
  %v330 = vadd.f32 %v227, %v329
  %v331 = vpop.f32.mrb[0].mxu0
  %v332 = vpop.f32.mrb[0].mxu0
  %v333 = vadd.f32 %v232, %v332
  %v334 = vpop.f32.mrb[0].mxu0
  %335 = vmatprep.mubr.bf16.mxu0 0
  %336 = vmatmul.mubr.bf16.gmra.mrb[0].mxu0 %v282
  %v337 = vpop.f32.mrb[0].mxu0
  %v338 = vadd.f32 %v237, %v337
  %v339 = vpop.f32.mrb[0].mxu0
  %v340 = vpop.f32.mrb[0].mxu0
  %v341 = vadd.f32 %v242, %v340
  %v342 = vpop.f32.mrb[0].mxu0
  %343 = vmatprep.mubr.bf16.mxu0 0
  %344 = vmatmul.mubr.bf16.gmra.mrb[0].mxu0 %v285
  %v345 = vpop.f32.mrb[0].mxu0
  %v346 = vadd.f32 %v247, %v345
  %v347 = vpop.f32.mrb[0].mxu0
  %v348 = vpop.f32.mrb[0].mxu0
  %v349 = vadd.f32 %v252, %v348
  %v350 = vpop.f32.mrb[0].mxu0
  %351 = vdwg.mxu0
  %v352 = vmax.f32 %v322, 0.0
  %v353 = vmax.f32 %v325, 0.0
  %v354 = vmax.f32 %v330, 0.0
  %v355 = vmax.f32 %v333, 0.0
  %v356 = vmax.f32 %v338, 0.0
  %v357 = vmax.f32 %v341, 0.0
  %v358 = vmax.f32 %v346, 0.0
  %v359 = vmax.f32 %v349, 0.0
  %v360 = vld [vmem:[%s5] sm:$0xf]
  %v361 = vld [vmem:[%s5 + $0x4] sm:$0x3]
  %v362 = vpack.c.bf16 %v353, %v352
  %v363 = vpack.c.bf16 %v355, %v354
  %v364 = vpack.c.bf16 %v357, %v356
  %v365 = vpack.c.bf16 %v359, %v358
  %v366 = vld [vmem:[%s6] sm:$0xff]
  %v367 = vld [vmem:[%s6 + $0x8] sm:$0xf]
  %369 = vset.pattern.permute.xlu0 0
  %370 = vperm.xlu0 %369, %v366
  %v371 = vpop.permute.xlu0 %370
  %374 = vset.pattern.permute.xlu0 0
  %375 = vperm.xlu0 %374, %v367
  %v376 = vpop.permute.xlu0 %375
  %v380 = vunpack.c.l.b16 %v360
  %v381 = vunpack.c.l.b16 %v361
  %v382 = vpack.c.b16 %v381, %v380
  %v384 = vsel %vm274, %v382, 0
  %386 = vmatprep.subr.bf16.mxu0 0
  %387 = vmatpush1.bf16.msra.mxu0 %v362
  %388 = vmatprep.subr.bf16.mxu0 0
  %389 = vmatpush1.bf16.msra.mxu0 %v363
  %390 = vmatprep.subr.bf16.mxu0 0
  %391 = vmatpush1.bf16.msra.mxu0 %v364
  %392 = vmatprep.subr.bf16.mxu0 0
  %393 = vmatpush1.bf16.msra.mxu0 %v365
  %394 = vmatprep.subr.bf16.mxu0 0
  %395 = vmatpush1.bf16.msra.mxu0 0
  %396 = vmatprep.subr.bf16.mxu0 0
  %397 = vmatpush1.bf16.msra.mxu0 0
  %398 = vmatprep.subr.bf16.mxu0 0
  %399 = vmatpush1.bf16.msra.mxu0 0
  %400 = vmatprep.subr.bf16.mxu0 0
  %401 = vmatpush1.bf16.msra.mxu0 0
  %402 = vmatprep.subr.bf16.mxu0 0
  %403 = vmatpush1.bf16.msra.mxu0 0
  %404 = vmatprep.subr.bf16.mxu0 0
  %405 = vmatpush1.bf16.msra.mxu0 0
  %406 = vmatprep.subr.bf16.mxu0 0
  %407 = vmatpush1.bf16.msra.mxu0 0
  %408 = vmatprep.subr.bf16.mxu0 0
  %409 = vmatpush1.bf16.msra.mxu0 0
  %410 = vmatprep.subr.bf16.mxu0 0
  %411 = vmatpush1.bf16.msra.mxu0 0
  %412 = vmatprep.subr.bf16.mxu0 0
  %413 = vmatpush1.bf16.msra.mxu0 0
  %414 = vmatprep.subr.bf16.mxu0 0
  %415 = vmatpush1.bf16.msra.mxu0 0
  %416 = vmatprep.subr.bf16.mxu0 0
  %417 = vmatpush1.bf16.msra.mxu0 0
  %418 = vmatprep.mubr.bf16.mxu0 0
  %419 = vmatmul.mubr.bf16.gmra.mrb[0].mxu0 %v384
  %v420 = vpop.f32.mrb[0].mxu0
  %v421 = vadd.f32 %v371, %v420
  %v422 = vpop.f32.mrb[0].mxu0
  %v423 = vpop.f32.mrb[0].mxu0
  %v424 = vadd.f32 %v376, %v423
  %v425 = vpop.f32.mrb[0].mxu0
  %426 = vdwg.mxu0
  %vm427 = vcmask 64512
  %v428 = vsel %vm427, %v421, -inf
  %vm429 = vcmask 60416
  %v430 = vsel %vm429, %v424, -inf
  %v431 = vmax.f32 %v428, %v430
  %v432 = vrot.slane %v431, 4
  %v433 = vmax.f32 %v431, %v432
  %v434 = vrot.slane %v433, 2
  %v435 = vmax.f32 %v433, %v434
  %v436 = vrot.slane %v435, 1
  %v437 = vmax.f32 %v435, %v436
  %v438 = vsub.f32 %v421, %v437
  %v439 = vsub.f32 %v424, %v437
  %v440 = vmul.f32 %v438, 1.442695
  %v441 = vpow.pop %v440
  %v442 = vmul.f32 %v439, 1.442695
  %v443 = vpow.pop %v442
  %v444 = vsel %vm427, %v441, 0.0
  %v445 = vsel %vm429, %v443, 0.0
  %v446 = vadd.f32 %v444, %v445
  %v447 = vrot.slane %v446, 4
  %v448 = vadd.f32 %v446, %v447
  %v449 = vrot.slane %v448, 2
  %v450 = vadd.f32 %v448, %v449
  %v451 = vrot.slane %v450, 1
  %v452 = vadd.f32 %v450, %v451
  %v453 = vrcp.pop %v452
  %v454 = vmul.f32 %v441, %v453
  %v455 = vmul.f32 %v443, %v453
  %456 = vst.msk [vmem:[%s7] sm:$0xff] %vm427, %v454
  %457 = vst.msk [vmem:[%s7 + $0x8] sm:$0xf] %vm429, %v455
  // Predicated region
  $region30: #{tpu_custom_call.1} parent=0 // pred_check
    _
  $region31: #{tpu_custom_call.1} parent=0 // pred_check_branch
    %459 = sbr.rel (0) target = $region33
  $region32: #{tpu_custom_call.1} parent=0 // pred_region
    _
  $region33: #{tpu_custom_call.1} parent=0 // pred_fallthru
    _
  // Predicated region
  $region34: #{tpu_custom_call.1} parent=0 // pred_check
    _
  $region35: #{tpu_custom_call.1} parent=0 // pred_check_branch
    %461 = sbr.rel (0) target = $region37
  $region36: #{tpu_custom_call.1} parent=0 // pred_region
    _
  $region37: #{tpu_custom_call.1} parent=0 // pred_fallthru
    _

</llo_original>
